<compile_context>
chip_gen: v7x
topology: tpu7x:2x2x1
jax: 0.10.0
libtpu: 0.0.40
codegen_flags: <defaults>
</compile_context>

<pallas_src>
import functools

import jax
import jax.numpy as jnp
from jax.experimental import pallas as pl
from jax.experimental.pallas import tpu as pltpu


# ------------------------------ Pallas kernel -------------------------------

def _nt_xent_kernel(z_ref, out_ref, *, batch_size, temperature):
    n = z_ref.shape[0]                       # N = 2 * batch_size (static)
    z = z_ref[...]                           # (N, Dp) f32, zero-padded lanes

    # --- L2-normalize rows (cosine similarity) ------------------------------
    norm_sq = jnp.sum(z * z, axis=-1, keepdims=True)                 # (N, 1)
    zn = z * jax.lax.rsqrt(jnp.maximum(norm_sq, 1e-16))              # (N, Dp)

    # --- full similarity matrix on the MXU: (zn @ zn^T) / T -----------------
    sim = jax.lax.dot_general(
        zn, zn, (((1,), (1,)), ((), ())),
        preferred_element_type=jnp.float32) * (1.0 / temperature)    # (N, N)

    rows = jax.lax.broadcasted_iota(jnp.int32, (n, n), 0)
    cols = jax.lax.broadcasted_iota(jnp.int32, (n, n), 1)
    is_self = rows == cols
    pair_col = jnp.where(rows < batch_size,
                         rows + batch_size, rows - batch_size)       # (i+B)%N
    is_pair = cols == pair_col

    # positive logit per row: sim[i, pair(i)]
    pos = jnp.sum(jnp.where(is_pair, sim, 0.0), axis=-1, keepdims=True)  # (N,1)

    # cross-entropy with label 0  ==  -pos + logsumexp over all j != i
    sim_ns = jnp.where(is_self, -1e30, sim)
    row_max = jnp.max(sim_ns, axis=-1, keepdims=True)                    # (N,1)
    sum_exp = jnp.sum(jnp.exp(sim_ns - row_max), axis=-1, keepdims=True)  # (N,1)
    per_row_loss = row_max + jnp.log(sum_exp) - pos                       # (N,1)

    # rank of the positive in a descending sort of logits
    # == number of negatives with strictly larger similarity.
    neg_mask = jnp.logical_not(is_self | is_pair)
    greater = jnp.where(neg_mask & (sim > pos), 1.0, 0.0)
    rank_rows = jnp.sum(greater, axis=-1, keepdims=True)                  # (N,1)

    # final cross-row reductions on the MXU (ones-vector matmul), scaled 1/N
    ones_row = jnp.ones((1, n), jnp.float32)
    inv_n = 1.0 / n
    total_loss = jnp.dot(ones_row, per_row_loss,
                         preferred_element_type=jnp.float32) * inv_n      # (1,1)
    avg_rank = jnp.dot(ones_row, rank_rows,
                       preferred_element_type=jnp.float32) * inv_n        # (1,1)

    # lane-dense (1, 128) output: lane 0 = loss, lane 1 = avg_rank
    lane = jax.lax.broadcasted_iota(jnp.int32, (1, out_ref.shape[1]), 1)
    out_ref[...] = (jnp.where(lane == 0, total_loss, 0.0)
                    + jnp.where(lane == 1, avg_rank, 0.0))


# ------------------------------- JAX wrapper ---------------------------------

def nt_xent_forward(z_i, z_j, temperature):
    """Exact NT_Xent.forward semantics: returns (loss, avg_rank)."""
    assert z_i.shape == z_j.shape and z_i.ndim == 2
    b, d = z_i.shape
    n = 2 * b
    z = jnp.concatenate([z_i, z_j], axis=0).astype(jnp.float32)      # (N, D)

    # zero-pad features to a multiple of 128 lanes (cosine sim is unchanged)
    d_pad = ((d + 127) // 128) * 128
    if d_pad != d:
        z = jnp.pad(z, ((0, 0), (0, d_pad - d)))

    out = pl.pallas_call(
        functools.partial(_nt_xent_kernel, batch_size=b,
                          temperature=float(temperature)),
        out_shape=jax.ShapeDtypeStruct((1, 128), jnp.float32),
        grid=(1,),
        in_specs=[pl.BlockSpec((n, d_pad), lambda i: (0, 0))],
        out_specs=pl.BlockSpec((1, 128), lambda i: (0, 0)),
        compiler_params=pltpu.CompilerParams(
            dimension_semantics=("arbitrary",)),
    )(z)
    return out[0, 0], out[0, 1]


# --------------------------- pure-JAX reference ------------------------------

def _nt_xent_reference(z_i, z_j, temperature):
    b = z_i.shape[0]
    n = 2 * b
    z = jnp.concatenate([z_i, z_j], axis=0).astype(jnp.float32)
    zn = z / jnp.maximum(jnp.linalg.norm(z, axis=-1, keepdims=True), 1e-8)
    sim = (zn @ zn.T) / temperature
    idx = jnp.arange(n)
    pair = jnp.where(idx < b, idx + b, idx - b)
    pos = sim[idx, pair]
    mask_self = jnp.eye(n, dtype=bool)
    lse = jax.scipy.special.logsumexp(jnp.where(mask_self, -jnp.inf, sim),
                                      axis=-1)
    loss = jnp.sum(lse - pos) / n
    neg_mask = ~(mask_self | (idx[None, :] == pair[:, None]))
    rank = jnp.sum(jnp.where(neg_mask & (sim > pos[:, None]), 1.0, 0.0),
                   axis=-1)
    return loss, jnp.mean(rank)


# ----------------------------------- main -------------------------------------

if __name__ == "__main__":
    batch_size = 8          # N = 16 rows (multiple of 8 sublanes)
    projection_dim = 32     # padded to 128 lanes inside the wrapper
    temperature = 0.5

    key = jax.random.PRNGKey(0)
    k_i, k_j = jax.random.split(key)
    z_i = jax.random.normal(k_i, (batch_size, projection_dim), dtype=jnp.float32)
    z_j = jax.random.normal(k_j, (batch_size, projection_dim), dtype=jnp.float32)

    loss, avg_rank = jax.jit(nt_xent_forward, static_argnums=2)(
        z_i, z_j, temperature)
    jax.block_until_ready((loss, avg_rank))

    ref_loss, ref_rank = _nt_xent_reference(z_i, z_j, temperature)
    assert jnp.allclose(loss, ref_loss, rtol=1e-3, atol=1e-3), (loss, ref_loss)
    assert jnp.allclose(avg_rank, ref_rank, rtol=1e-3, atol=1e-3), (avg_rank, ref_rank)
    print("KERNEL_OK")
</pallas_src>

<mosaic_0001>
module attributes {stable_mosaic.version = 11 : i64} {
  func.func @_nt_xent_kernel(%arg0: i32, %arg1: memref<16x128xf32, #tpu.memory_space<vmem>>, %arg2: memref<1x128xf32, #tpu.memory_space<vmem>>) attributes {dimension_semantics = [#tpu.dimension_semantics<arbitrary>], iteration_bounds = array<i64: 1>, scalar_prefetch = 0 : i64, scratch_operands = 0 : i64, tpu.core_type = #tpu.core_type<tc>, window_params = [{pipeline_mode = #tpu.pipeline_mode<synchronous>, transform_indices = @transform_0, window_bounds = array<i64: 16, 128>}, {pipeline_mode = #tpu.pipeline_mode<synchronous>, transform_indices = @transform_1, window_bounds = array<i64: 1, 128>}]} {
    %c0 = arith.constant 0 : index
    %c0_0 = arith.constant 0 : index
    %0 = vector.load %arg1[%c0, %c0_0] : memref<16x128xf32, #tpu.memory_space<vmem>>, vector<16x128xf32>
    %1 = arith.mulf %0, %0 : vector<16x128xf32>
    %cst = arith.constant dense<0.000000e+00> : vector<16xf32>
    %2 = vector.multi_reduction <add>, %1, %cst [1] : vector<16x128xf32> to vector<16xf32>
    %3 = vector.shape_cast %2 : vector<16xf32> to vector<16x1xf32>
    %cst_1 = arith.constant 1.000000e-16 : f32
    %4 = vector.broadcast %cst_1 : f32 to vector<16x1xf32>
    %5 = arith.maximumf %3, %4 : vector<16x1xf32>
    %6 = math.rsqrt %5 : vector<16x1xf32>
    %7 = vector.broadcast %6 : vector<16x1xf32> to vector<16x128xf32>
    %8 = arith.mulf %0, %7 : vector<16x128xf32>
    %cst_2 = arith.constant dense<0.000000e+00> : vector<16x16xf32>
    %9 = tpu.matmul %8, %8, %cst_2 {dimension_numbers = #tpu.dot_dimension_numbers<[1], [1], [0], [0], [0, 0, 1, 0], [], []>} : vector<16x128xf32>, vector<16x128xf32>, vector<16x16xf32> -> vector<16x16xf32>
    %cst_3 = arith.constant 2.000000e+00 : f32
    %10 = vector.broadcast %cst_3 : f32 to vector<16x16xf32>
    %11 = arith.mulf %9, %10 : vector<16x16xf32>
    %12 = tpu.iota {dimensions = array<i32: 0>} : vector<16x16xi32>
    %13 = tpu.iota {dimensions = array<i32: 1>} : vector<16x16xi32>
    %14 = arith.cmpi eq, %12, %13 : vector<16x16xi32>
    %c8_i32 = arith.constant 8 : i32
    %15 = vector.broadcast %c8_i32 : i32 to vector<16x16xi32>
    %16 = arith.cmpi slt, %12, %15 : vector<16x16xi32>
    %c8_i32_4 = arith.constant 8 : i32
    %17 = vector.broadcast %c8_i32_4 : i32 to vector<16x16xi32>
    %18 = arith.addi %12, %17 : vector<16x16xi32>
    %c8_i32_5 = arith.constant 8 : i32
    %19 = vector.broadcast %c8_i32_5 : i32 to vector<16x16xi32>
    %20 = arith.subi %12, %19 : vector<16x16xi32>
    %21 = arith.select %16, %18, %20 : vector<16x16xi1>, vector<16x16xi32>
    %22 = arith.cmpi eq, %13, %21 : vector<16x16xi32>
    %cst_6 = arith.constant 0.000000e+00 : f32
    %23 = vector.broadcast %cst_6 : f32 to vector<16x16xf32>
    %24 = arith.select %22, %11, %23 : vector<16x16xi1>, vector<16x16xf32>
    %cst_7 = arith.constant dense<0.000000e+00> : vector<16xf32>
    %25 = vector.multi_reduction <add>, %24, %cst_7 [1] : vector<16x16xf32> to vector<16xf32>
    %26 = vector.shape_cast %25 : vector<16xf32> to vector<16x1xf32>
    %cst_8 = arith.constant -1.000000e+30 : f32
    %27 = vector.broadcast %cst_8 : f32 to vector<16x16xf32>
    %28 = arith.select %14, %27, %11 : vector<16x16xi1>, vector<16x16xf32>
    %cst_9 = arith.constant dense<0xFF800000> : vector<16xf32>
    %29 = vector.multi_reduction <maximumf>, %28, %cst_9 [1] : vector<16x16xf32> to vector<16xf32>
    %30 = vector.shape_cast %29 : vector<16xf32> to vector<16x1xf32>
    %31 = vector.broadcast %30 : vector<16x1xf32> to vector<16x16xf32>
    %32 = arith.subf %28, %31 : vector<16x16xf32>
    %33 = math.exp %32 : vector<16x16xf32>
    %cst_10 = arith.constant dense<0.000000e+00> : vector<16xf32>
    %34 = vector.multi_reduction <add>, %33, %cst_10 [1] : vector<16x16xf32> to vector<16xf32>
    %35 = vector.shape_cast %34 : vector<16xf32> to vector<16x1xf32>
    %36 = math.log %35 : vector<16x1xf32>
    %37 = arith.addf %30, %36 : vector<16x1xf32>
    %38 = arith.subf %37, %26 : vector<16x1xf32>
    %39 = arith.ori %14, %22 : vector<16x16xi1>
    %cst_11 = arith.constant dense<true> : vector<16x16xi1>
    %40 = arith.xori %39, %cst_11 : vector<16x16xi1>
    %41 = vector.broadcast %26 : vector<16x1xf32> to vector<16x16xf32>
    %42 = arith.cmpf ogt, %11, %41 : vector<16x16xf32>
    %43 = arith.andi %40, %42 : vector<16x16xi1>
    %cst_12 = arith.constant 1.000000e+00 : f32
    %cst_13 = arith.constant 0.000000e+00 : f32
    %44 = vector.broadcast %cst_12 : f32 to vector<16x16xf32>
    %45 = vector.broadcast %cst_13 : f32 to vector<16x16xf32>
    %46 = arith.select %43, %44, %45 : vector<16x16xi1>, vector<16x16xf32>
    %cst_14 = arith.constant dense<0.000000e+00> : vector<16xf32>
    %47 = vector.multi_reduction <add>, %46, %cst_14 [1] : vector<16x16xf32> to vector<16xf32>
    %48 = vector.shape_cast %47 : vector<16xf32> to vector<16x1xf32>
    %cst_15 = arith.constant 1.000000e+00 : f32
    %49 = vector.broadcast %cst_15 : f32 to vector<1x16xf32>
    %cst_16 = arith.constant dense<0.000000e+00> : vector<1x1xf32>
    %50 = tpu.matmul %49, %38, %cst_16 {dimension_numbers = #tpu.dot_dimension_numbers<[1], [0], [0], [1], [0, 0, 1, 1], [], []>} : vector<1x16xf32>, vector<16x1xf32>, vector<1x1xf32> -> vector<1x1xf32>
    %cst_17 = arith.constant 6.250000e-02 : f32
    %51 = vector.broadcast %cst_17 : f32 to vector<1x1xf32>
    %52 = arith.mulf %50, %51 : vector<1x1xf32>
    %cst_18 = arith.constant dense<0.000000e+00> : vector<1x1xf32>
    %53 = tpu.matmul %49, %48, %cst_18 {dimension_numbers = #tpu.dot_dimension_numbers<[1], [0], [0], [1], [0, 0, 1, 1], [], []>} : vector<1x16xf32>, vector<16x1xf32>, vector<1x1xf32> -> vector<1x1xf32>
    %cst_19 = arith.constant 6.250000e-02 : f32
    %54 = vector.broadcast %cst_19 : f32 to vector<1x1xf32>
    %55 = arith.mulf %53, %54 : vector<1x1xf32>
    %56 = tpu.iota {dimensions = array<i32: 1>} : vector<1x128xi32>
    %c0_i32 = arith.constant 0 : i32
    %57 = vector.broadcast %c0_i32 : i32 to vector<1x128xi32>
    %58 = arith.cmpi eq, %56, %57 : vector<1x128xi32>
    %cst_20 = arith.constant 0.000000e+00 : f32
    %59 = vector.shape_cast %52 : vector<1x1xf32> to vector<1x1xf32>
    %60 = vector.broadcast %59 : vector<1x1xf32> to vector<1x128xf32>
    %61 = vector.broadcast %cst_20 : f32 to vector<1x128xf32>
    %62 = arith.select %58, %60, %61 : vector<1x128xi1>, vector<1x128xf32>
    %c1_i32 = arith.constant 1 : i32
    %63 = vector.broadcast %c1_i32 : i32 to vector<1x128xi32>
    %64 = arith.cmpi eq, %56, %63 : vector<1x128xi32>
    %cst_21 = arith.constant 0.000000e+00 : f32
    %65 = vector.shape_cast %55 : vector<1x1xf32> to vector<1x1xf32>
    %66 = vector.broadcast %65 : vector<1x1xf32> to vector<1x128xf32>
    %67 = vector.broadcast %cst_21 : f32 to vector<1x128xf32>
    %68 = arith.select %64, %66, %67 : vector<1x128xi1>, vector<1x128xf32>
    %69 = arith.addf %62, %68 : vector<1x128xf32>
    %c0_22 = arith.constant 0 : index
    %c0_23 = arith.constant 0 : index
    %70 = vector.load %arg2[%c0_22, %c0_23] : memref<1x128xf32, #tpu.memory_space<vmem>>, vector<1x128xf32>
    tpu.vector_store %arg2[%c0_22, %c0_23], %69 {strides = array<i32>} : memref<1x128xf32, #tpu.memory_space<vmem>>, vector<1x128xf32>,
    return
  }
  func.func @transform_0(%arg0: i32) -> (i32, i32) {
    %c0_i32 = arith.constant 0 : i32
    %c0_i32_0 = arith.constant 0 : i32
    %c0_i32_1 = arith.constant 0 : i32
    return %c0_i32, %c0_i32_0 : i32, i32
  }
  func.func @transform_1(%arg0: i32) -> (i32, i32) {
    %c0_i32 = arith.constant 0 : i32
    %c0_i32_0 = arith.constant 0 : i32
    %c0_i32_1 = arith.constant 0 : i32
    return %c0_i32, %c0_i32_0 : i32, i32
  }
}

</mosaic_0001>

<llo_original>
// kernel: nt_xent_forward.1
$region0: #{nt_xent_forward.1}
  #allocation0 [shape = 'u32[]', space=smem, size = 0x4, offset = 0x4, fixed_abs, tag = 'smem constant byte address 0x4 - core index']
  #allocation1 [shape = 'u32[144,128]{1,0:T(1,128)}', space=vmem, size = 0x12000, scoped, tag = 'internal scratch']
  %s0 = inlined_call_operand.vmem [shape: f32[16,128], index: 0, kind: input, shape index: {}]
  %s1 = inlined_call_operand.vmem [shape: f32[1,128], index: 1, kind: output, shape index: {}]
  %s2 = sld [smem:[#allocation0]]
  $region14: #{nt_xent_forward.1} parent=0
    _
  %s4 = ssub.s32 1, %s2
  %s5 = scalar_select 0, %s4, %s2
  // Predicated region
  $region2: #{nt_xent_forward.1} parent=0 // pred_check
    _
  $region3: #{nt_xent_forward.1} parent=0 // pred_check_branch
    %7 = sbr.rel (0) target = $region5
  $region4: #{nt_xent_forward.1} parent=0 // pred_region
    _
  $region5: #{nt_xent_forward.1} parent=0 // pred_fallthru
    _
  %v8 = vld [vmem:[%s0] sm:$0xff]
  %v9 = vld [vmem:[%s0 + $0x8] sm:$0xff]
  %v10 = vmul.f32 %v8, %v8
  %v11 = vmul.f32 %v9, %v9
  %12 = vadd.xlane.f32.xlu0 %v10
  %v13 = vpop.xlane.xlu0 %12
  %14 = vadd.xlane.f32.xlu0 %v11
  %v15 = vpop.xlane.xlu0 %14
  %v16 = vmax.f32 %v13, 1e-16
  %v17 = vmax.f32 %v15, 1e-16
  %v18 = vrsqrt.pop %v16
  %v19 = vrsqrt.pop %v17
  %v20 = vmul.f32 %v8, %v18
  %v21 = vmul.f32 %v9, %v19
  %22 = vmatprep.subr.mxu0 0.0
  %23 = vmatpush1.xpose.msra.mxu0 %v20
  %24 = vmatprep.subr.mxu0 0.0
  %25 = vmatpush1.xpose.msra.mxu0 %v21
  %26 = vmatprep.subr.mxu0 0.0
  %27 = vmatpush1.xpose.msra.mxu0 0.0
  %28 = vmatprep.subr.mxu0 0.0
  %29 = vmatpush1.xpose.msra.mxu0 0.0
  %30 = vmatprep.subr.mxu0 0.0
  %31 = vmatpush1.xpose.msra.mxu0 0.0
  %32 = vmatprep.subr.mxu0 0.0
  %33 = vmatpush1.xpose.msra.mxu0 0.0
  %34 = vmatprep.subr.mxu0 0.0
  %35 = vmatpush1.xpose.msra.mxu0 0.0
  %36 = vmatprep.subr.mxu0 0.0
  %37 = vmatpush1.xpose.msra.mxu0 0.0
  %38 = vmatprep.subr.mxu0 0.0
  %39 = vmatpush1.xpose.msra.mxu0 0.0
  %40 = vmatprep.subr.mxu0 0.0
  %41 = vmatpush1.xpose.msra.mxu0 0.0
  %42 = vmatprep.subr.mxu0 0.0
  %43 = vmatpush1.xpose.msra.mxu0 0.0
  %44 = vmatprep.subr.mxu0 0.0
  %45 = vmatpush1.xpose.msra.mxu0 0.0
  %46 = vmatprep.subr.mxu0 0.0
  %47 = vmatpush1.xpose.msra.mxu0 0.0
  %48 = vmatprep.subr.mxu0 0.0
  %49 = vmatpush1.xpose.msra.mxu0 0.0
  %50 = vmatprep.subr.mxu0 0.0
  %51 = vmatpush1.xpose.msra.mxu0 0.0
  %52 = vmatprep.subr.mxu0 0.0
  %53 = vmatpush1.xpose.msra.mxu0 0.0
  %54 = vmatprep.subr.mxu0 0.0
  %55 = vmatpush1.xpose.msra.mxu0 0.0
  %56 = vmatprep.subr.mxu0 0.0
  %57 = vmatpush1.xpose.msra.mxu0 0.0
  %58 = vmatprep.subr.mxu0 0.0
  %59 = vmatpush1.xpose.msra.mxu0 0.0
  %60 = vmatprep.subr.mxu0 0.0
  %61 = vmatpush1.xpose.msra.mxu0 0.0
  %62 = vmatprep.subr.mxu0 0.0
  %63 = vmatpush1.xpose.msra.mxu0 0.0
  %64 = vmatprep.subr.mxu0 0.0
  %65 = vmatpush1.xpose.msra.mxu0 0.0
  %66 = vmatprep.subr.mxu0 0.0
  %67 = vmatpush1.xpose.msra.mxu0 0.0
  %68 = vmatprep.subr.mxu0 0.0
  %69 = vmatpush1.xpose.msra.mxu0 0.0
  %70 = vmatprep.subr.mxu0 0.0
  %71 = vmatpush1.xpose.msra.mxu0 0.0
  %72 = vmatprep.subr.mxu0 0.0
  %73 = vmatpush1.xpose.msra.mxu0 0.0
  %74 = vmatprep.subr.mxu0 0.0
  %75 = vmatpush1.xpose.msra.mxu0 0.0
  %76 = vmatprep.subr.mxu0 0.0
  %77 = vmatpush1.xpose.msra.mxu0 0.0
  %78 = vmatprep.subr.mxu0 0.0
  %79 = vmatpush1.xpose.msra.mxu0 0.0
  %80 = vmatprep.subr.mxu0 0.0
  %81 = vmatpush1.xpose.msra.mxu0 0.0
  %82 = vmatprep.subr.mxu0 0.0
  %83 = vmatpush1.xpose.msra.mxu0 0.0
  %84 = vmatprep.subr.mxu0 0.0
  %85 = vmatpush1.xpose.msra.mxu0 0.0
  %86 = vmatprep.mubr.f32.mxu0 0.0
  %87 = vmatmul.mubr.f32.gmra.mrb[0].mxu0 %v20
  %v88 = vpop.f32.mrb[0].mxu0
  %v89 = vadd.f32 0.0, %v88
  %v90 = vpop.f32.mrb[0].mxu0
  %91 = vmatprep.mubr.f32.mxu0 0.0
  %92 = vmatmul.mubr.f32.gmra.mrb[0].mxu0 %v21
  %v93 = vpop.f32.mrb[0].mxu0
  %v94 = vadd.f32 0.0, %v93
  %v95 = vpop.f32.mrb[0].mxu0
  %96 = vdwg.mxu0
  %v97 = vmul.f32 %v89, 2.0
  %v98 = vmul.f32 %v94, 2.0
  %v99 = vlaneseq
  %v100 = vshrl.u32 %v99, 7
  %v101 = vadd.s32 %v100, 8
  %v102 = vlaneseq
  %v103 = vand.u32 %v102, 127
  %vm104 = vcmp.eq.s32.totalorder %v100, %v103
  %vm105 = vcmp.eq.s32.totalorder %v101, %v103
  %vm106 = vcmp.lt.s32.totalorder %v100, 8
  %vm107 = vcmp.lt.s32.totalorder %v101, 8
  %v108 = vadd.s32 %v101, 8
  %v109 = vsub.s32 %v100, 8
  %v110 = vsel %vm106, %v101, %v109
  %v111 = vsel %vm107, %v108, %v100
  %vm112 = vcmp.eq.s32.totalorder %v103, %v110
  %vm113 = vcmp.eq.s32.totalorder %v103, %v111
  %v114 = vsel %vm112, %v97, 0.0
  %v115 = vsel %vm113, %v98, 0.0
  %vm116 = vcmask 130048
  %v117 = vsel %vm116, %v114, 0.0
  %118 = vadd.xlane.f32.xlu0 %v117
  %v119 = vpop.xlane.xlu0 %118
  %v120 = vsel %vm116, %v115, 0.0
  %121 = vadd.xlane.f32.xlu0 %v120
  %v122 = vpop.xlane.xlu0 %121
  %v123 = vsel %vm104, -1e+30, %v97
  %v124 = vsel %vm105, -1e+30, %v98
  %v125 = vsel %vm116, %v123, -inf
  %126 = vmax.xlane.f32.xlu0 %v125
  %v127 = vpop.xlane.xlu0 %126
  %v128 = vsel %vm116, %v124, -inf
  %129 = vmax.xlane.f32.xlu0 %v128
  %v130 = vpop.xlane.xlu0 %129
  %v131 = vsub.f32 %v123, %v127
  %v132 = vsub.f32 %v124, %v130
  %v133 = vmul.f32 %v131, 1.442695
  %v134 = vpow.pop %v133
  %v135 = vmul.f32 %v132, 1.442695
  %v136 = vpow.pop %v135
  %v137 = vsel %vm116, %v134, 0.0
  %138 = vadd.xlane.f32.xlu0 %v137
  %v139 = vpop.xlane.xlu0 %138
  %v140 = vsel %vm116, %v136, 0.0
  %141 = vadd.xlane.f32.xlu0 %v140
  %v142 = vpop.xlane.xlu0 %141
  %v143 = vlog2.pop %v139
  %v144 = vmul.f32 %v143, 0.6931472
  %v145 = vlog2.pop %v142
  %v146 = vmul.f32 %v145, 0.6931472
  %v147 = vadd.f32 %v127, %v144
  %v148 = vadd.f32 %v130, %v146
  %v149 = vsub.f32 %v147, %v119
  %v150 = vsub.f32 %v148, %v122
  %vm151 = vmor %vm104, %vm112
  %vm152 = vmor %vm105, %vm113
  %vm153 = vmxor %vm151, 1
  %vm154 = vmxor %vm152, 1
  %vm155 = vcmp.gt.f32.partialorder %v97, %v119
  %vm156 = vcmp.gt.f32.partialorder %v98, %v122
  %vm157 = vmand %vm153, %vm155
  %vm158 = vmand %vm154, %vm156
  %v159 = vsel %vm157, 1.0, 0.0
  %v160 = vsel %vm158, 1.0, 0.0
  %v161 = vsel %vm116, %v159, 0.0
  %162 = vadd.xlane.f32.xlu0 %v161
  %v163 = vpop.xlane.xlu0 %162
  %v164 = vsel %vm116, %v160, 0.0
  %165 = vadd.xlane.f32.xlu0 %v164
  %v166 = vpop.xlane.xlu0 %165
  %v168 = vsel %vm116, 1.0, 0
  %170 = vmatprep.subr.mxu0 0.0
  %171 = vmatpush1.msra.mxu0 %v149
  %172 = vmatprep.subr.mxu0 0.0
  %173 = vmatpush1.msra.mxu0 %v150
  %174 = vmatprep.subr.mxu0 0.0
  %175 = vmatpush1.msra.mxu0 0.0
  %176 = vmatprep.subr.mxu0 0.0
  %177 = vmatpush1.msra.mxu0 0.0
  %178 = vmatprep.subr.mxu0 0.0
  %179 = vmatpush1.msra.mxu0 0.0
  %180 = vmatprep.subr.mxu0 0.0
  %181 = vmatpush1.msra.mxu0 0.0
  %182 = vmatprep.subr.mxu0 0.0
  %183 = vmatpush1.msra.mxu0 0.0
  %184 = vmatprep.subr.mxu0 0.0
  %185 = vmatpush1.msra.mxu0 0.0
  %186 = vmatprep.subr.mxu0 0.0
  %187 = vmatpush1.msra.mxu0 0.0
  %188 = vmatprep.subr.mxu0 0.0
  %189 = vmatpush1.msra.mxu0 0.0
  %190 = vmatprep.subr.mxu0 0.0
  %191 = vmatpush1.msra.mxu0 0.0
  %192 = vmatprep.subr.mxu0 0.0
  %193 = vmatpush1.msra.mxu0 0.0
  %194 = vmatprep.subr.mxu0 0.0
  %195 = vmatpush1.msra.mxu0 0.0
  %196 = vmatprep.subr.mxu0 0.0
  %197 = vmatpush1.msra.mxu0 0.0
  %198 = vmatprep.subr.mxu0 0.0
  %199 = vmatpush1.msra.mxu0 0.0
  %200 = vmatprep.subr.mxu0 0.0
  %201 = vmatpush1.msra.mxu0 0.0
  %202 = vmatprep.subr.mxu0 0.0
  %203 = vmatpush1.msra.mxu0 0.0
  %204 = vmatprep.subr.mxu0 0.0
  %205 = vmatpush1.msra.mxu0 0.0
  %206 = vmatprep.subr.mxu0 0.0
  %207 = vmatpush1.msra.mxu0 0.0
  %208 = vmatprep.subr.mxu0 0.0
  %209 = vmatpush1.msra.mxu0 0.0
  %210 = vmatprep.subr.mxu0 0.0
  %211 = vmatpush1.msra.mxu0 0.0
  %212 = vmatprep.subr.mxu0 0.0
  %213 = vmatpush1.msra.mxu0 0.0
  %214 = vmatprep.subr.mxu0 0.0
  %215 = vmatpush1.msra.mxu0 0.0
  %216 = vmatprep.subr.mxu0 0.0
  %217 = vmatpush1.msra.mxu0 0.0
  %218 = vmatprep.subr.mxu0 0.0
  %219 = vmatpush1.msra.mxu0 0.0
  %220 = vmatprep.subr.mxu0 0.0
  %221 = vmatpush1.msra.mxu0 0.0
  %222 = vmatprep.subr.mxu0 0.0
  %223 = vmatpush1.msra.mxu0 0.0
  %224 = vmatprep.subr.mxu0 0.0
  %225 = vmatpush1.msra.mxu0 0.0
  %226 = vmatprep.subr.mxu0 0.0
  %227 = vmatpush1.msra.mxu0 0.0
  %228 = vmatprep.subr.mxu0 0.0
  %229 = vmatpush1.msra.mxu0 0.0
  %230 = vmatprep.subr.mxu0 0.0
  %231 = vmatpush1.msra.mxu0 0.0
  %232 = vmatprep.subr.mxu0 0.0
  %233 = vmatpush1.msra.mxu0 0.0
  %234 = vmatprep.mubr.f32.mxu0 0.0
  %235 = vmatmul.mubr.f32.gmra.mrb[0].mxu0 %v168
  %v236 = vpop.f32.mrb[0].mxu0
  %v237 = vadd.f32 0.0, %v236
  %v238 = vpop.f32.mrb[0].mxu0
  %239 = vdwg.mxu0
  %v240 = vmul.f32 %v237, 0.0625
  %241 = vmatprep.subr.mxu0 0.0
  %242 = vmatpush1.msra.mxu0 %v163
  %243 = vmatprep.subr.mxu0 0.0
  %244 = vmatpush1.msra.mxu0 %v166
  %245 = vmatprep.subr.mxu0 0.0
  %246 = vmatpush1.msra.mxu0 0.0
  %247 = vmatprep.subr.mxu0 0.0
  %248 = vmatpush1.msra.mxu0 0.0
  %249 = vmatprep.subr.mxu0 0.0
  %250 = vmatpush1.msra.mxu0 0.0
  %251 = vmatprep.subr.mxu0 0.0
  %252 = vmatpush1.msra.mxu0 0.0
  %253 = vmatprep.subr.mxu0 0.0
  %254 = vmatpush1.msra.mxu0 0.0
  %255 = vmatprep.subr.mxu0 0.0
  %256 = vmatpush1.msra.mxu0 0.0
  %257 = vmatprep.subr.mxu0 0.0
  %258 = vmatpush1.msra.mxu0 0.0
  %259 = vmatprep.subr.mxu0 0.0
  %260 = vmatpush1.msra.mxu0 0.0
  %261 = vmatprep.subr.mxu0 0.0
  %262 = vmatpush1.msra.mxu0 0.0
  %263 = vmatprep.subr.mxu0 0.0
  %264 = vmatpush1.msra.mxu0 0.0
  %265 = vmatprep.subr.mxu0 0.0
  %266 = vmatpush1.msra.mxu0 0.0
  %267 = vmatprep.subr.mxu0 0.0
  %268 = vmatpush1.msra.mxu0 0.0
  %269 = vmatprep.subr.mxu0 0.0
  %270 = vmatpush1.msra.mxu0 0.0
  %271 = vmatprep.subr.mxu0 0.0
  %272 = vmatpush1.msra.mxu0 0.0
  %273 = vmatprep.subr.mxu0 0.0
  %274 = vmatpush1.msra.mxu0 0.0
  %275 = vmatprep.subr.mxu0 0.0
  %276 = vmatpush1.msra.mxu0 0.0
  %277 = vmatprep.subr.mxu0 0.0
  %278 = vmatpush1.msra.mxu0 0.0
  %279 = vmatprep.subr.mxu0 0.0
  %280 = vmatpush1.msra.mxu0 0.0
  %281 = vmatprep.subr.mxu0 0.0
  %282 = vmatpush1.msra.mxu0 0.0
  %283 = vmatprep.subr.mxu0 0.0
  %284 = vmatpush1.msra.mxu0 0.0
  %285 = vmatprep.subr.mxu0 0.0
  %286 = vmatpush1.msra.mxu0 0.0
  %287 = vmatprep.subr.mxu0 0.0
  %288 = vmatpush1.msra.mxu0 0.0
  %289 = vmatprep.subr.mxu0 0.0
  %290 = vmatpush1.msra.mxu0 0.0
  %291 = vmatprep.subr.mxu0 0.0
  %292 = vmatpush1.msra.mxu0 0.0
  %293 = vmatprep.subr.mxu0 0.0
  %294 = vmatpush1.msra.mxu0 0.0
  %295 = vmatprep.subr.mxu0 0.0
  %296 = vmatpush1.msra.mxu0 0.0
  %297 = vmatprep.subr.mxu0 0.0
  %298 = vmatpush1.msra.mxu0 0.0
  %299 = vmatprep.subr.mxu0 0.0
  %300 = vmatpush1.msra.mxu0 0.0
  %301 = vmatprep.subr.mxu0 0.0
  %302 = vmatpush1.msra.mxu0 0.0
  %303 = vmatprep.subr.mxu0 0.0
  %304 = vmatpush1.msra.mxu0 0.0
  %305 = vmatprep.mubr.f32.mxu0 0.0
  %306 = vmatmul.mubr.f32.gmra.mrb[0].mxu0 %v168
  %v307 = vpop.f32.mrb[0].mxu0
  %v308 = vadd.f32 0.0, %v307
  %v309 = vpop.f32.mrb[0].mxu0
  %310 = vdwg.mxu0
  %v311 = vmul.f32 %v308, 0.0625
  %vm312 = vcmp.eq.s32.totalorder %v103, 0
  %314 = vset.pattern.permute.xlu0 0
  %315 = vperm.xlu0 %314, %v240
  %v316 = vpop.permute.xlu0 %315
  %v318 = vsel %vm312, %v316, 0.0
  %vm319 = vcmp.eq.s32.totalorder %v103, 1
  %321 = vset.pattern.permute.xlu0 0
  %322 = vperm.xlu0 %321, %v311
  %v323 = vpop.permute.xlu0 %322
  %v325 = vsel %vm319, %v323, 0.0
  %v326 = vadd.f32 %v318, %v325
  %327 = vst [vmem:[%s1] sm:$0x1] %v326
  // Predicated region
  $region6: #{nt_xent_forward.1} parent=0 // pred_check
    _
  $region7: #{nt_xent_forward.1} parent=0 // pred_check_branch
    %329 = sbr.rel (0) target = $region9
  $region8: #{nt_xent_forward.1} parent=0 // pred_region
    _
  $region9: #{nt_xent_forward.1} parent=0 // pred_fallthru
    _
  // Predicated region
  $region10: #{nt_xent_forward.1} parent=0 // pred_check
    _
  $region11: #{nt_xent_forward.1} parent=0 // pred_check_branch
    %331 = sbr.rel (0) target = $region13
  $region12: #{nt_xent_forward.1} parent=0 // pred_region
    _
  $region13: #{nt_xent_forward.1} parent=0 // pred_fallthru
    _

</llo_original>
